<compile_context>
chip_gen: v7x
topology: tpu7x:2x2x1
jax: 0.10.0
libtpu: 0.0.40
codegen_flags: <defaults>
</compile_context>

<pallas_src>
import functools

import jax
import jax.numpy as jnp
from jax.experimental import pallas as pl
from jax.experimental.pallas import tpu as pltpu


def _round_up(x, m):
    return ((x + m - 1) // m) * m


def _fused_head_kernel(x_ref, w_ref, bc_ref, bb_ref, cls_ref, bbox_ref, *, kc_pad):
    """Fused cls_score + bbox_pred linear head.

    x_ref:    (block_n, C)         activations in their HBM dtype (f32)
    w_ref:    (C, kc_pad + kb_pad) bf16 fused [cls | bbox] weight, VMEM-resident
    bc_ref:   (1, kc_pad)          f32 cls bias (lane-padded)
    bb_ref:   (1, kb_pad)          f32 bbox bias (lane-padded)
    cls_ref:  (block_n, kc_pad)    lane-dense output
    bbox_ref: (block_n, kb_pad)    lane-dense output
    """
    # In-kernel downcast: f32 HBM stream (4 B/elem) -> bf16 MXU feed; the VPU
    # convert hides under the DMA/MXU work.
    x = x_ref[...].astype(w_ref.dtype)
    acc = jnp.dot(x, w_ref[...], preferred_element_type=jnp.float32)
    # kc_pad is a multiple of 128, so both slices sit on vreg tile boundaries.
    cls_ref[...] = (acc[:, :kc_pad] + bc_ref[...]).astype(cls_ref.dtype)
    bbox_ref[...] = (acc[:, kc_pad:] + bb_ref[...]).astype(bbox_ref.dtype)


def prepare_params(w_cls, b_cls, w_bbox, b_bbox, compute_dtype=jnp.bfloat16):
    """One-time (per-checkpoint) prep: transpose, lane-pad each head, fuse, downcast.

    PyTorch nn.Linear layout in:  w_cls (num_classes, C), w_bbox (4*num_classes, C).
    Each head's output axis is padded to a multiple of 128 *before* fusing so
    the in-kernel split lands on a lane-tile boundary.
    """
    num_classes, c = w_cls.shape
    num_bbox = w_bbox.shape[0]
    kc_pad = _round_up(num_classes, 128)
    kb_pad = _round_up(num_bbox, 128)
    # NOTE: if C % 128 != 0 for a custom head, pad C with zero rows here (and
    # zero-pad x upstream) to keep the contraction dim lane-dense.  torchvision
    # defaults (C=1024) are already aligned; correctness is unaffected either way.

    w_c = jnp.pad(jnp.transpose(w_cls), ((0, 0), (0, kc_pad - num_classes)))
    w_b = jnp.pad(jnp.transpose(w_bbox), ((0, 0), (0, kb_pad - num_bbox)))
    w_fused = jnp.concatenate([w_c, w_b], axis=1).astype(compute_dtype)  # (C, kc+kb)

    b_c = jnp.pad(b_cls.astype(jnp.float32), (0, kc_pad - num_classes)).reshape(1, kc_pad)
    b_b = jnp.pad(b_bbox.astype(jnp.float32), (0, kb_pad - num_bbox)).reshape(1, kb_pad)

    return {
        "w": w_fused,            # (C, kc_pad + kb_pad) bf16
        "b_cls": b_c,            # (1, kc_pad) f32
        "b_bbox": b_b,           # (1, kb_pad) f32
        "num_classes": num_classes,
        "num_bbox": num_bbox,
        "kc_pad": kc_pad,
        "kb_pad": kb_pad,
    }


def fastrcnn_predictor(x, params, *, max_block_n=1024, out_dtype=jnp.float32):
    """JAX wrapper reproducing FastRCNNPredictor.forward.

    Args:
      x:      (N, C) or (N, C, 1, 1) activations (any float dtype; cast in-kernel).
      params: output of prepare_params.
      max_block_n: row-tile cap.  1024 is the v6e sweet spot; keep <=512 on v5e.
      out_dtype: output store dtype (bf16 is an optional precision tradeoff).
    Returns:
      (scores (N, num_classes), bbox_deltas (N, 4*num_classes)).
    """
    if x.ndim == 4:
        assert x.shape[2:] == (1, 1), (
            f"x has the wrong shape, expecting the last two dimensions to be "
            f"[1,1] instead of {list(x.shape[2:])}")
    x2d = x.reshape(x.shape[0], -1)            # flatten(start_dim=1)

    w = params["w"]
    bc = params["b_cls"]
    bb = params["b_bbox"]
    num_classes = params["num_classes"]
    num_bbox = params["num_bbox"]
    kc_pad = params["kc_pad"]
    kb_pad = params["kb_pad"]

    n, c = x2d.shape
    assert c == w.shape[0], (
        f"in_channels mismatch: x has {c}, weights have {w.shape[0]}")
    k_pad = w.shape[1]                          # kc_pad + kb_pad

    # Row tiling: sublane-aligned tile; ragged last block handled by Pallas
    # (no wrapper-side pad / extra HBM pass over x).
    block_n = min(max_block_n, _round_up(max(n, 1), 8))
    grid = (pl.cdiv(n, block_n),)

    itemsize = lambda a: jnp.dtype(a.dtype).itemsize
    out_isz = jnp.dtype(out_dtype).itemsize
    cost = pl.CostEstimate(
        flops=2 * n * c * k_pad,
        transcendentals=0,
        bytes_accessed=(x2d.size * itemsize(x2d)
                        + w.size * itemsize(w)
                        + bc.size * itemsize(bc) + bb.size * itemsize(bb)
                        + n * k_pad * out_isz),
    )

    kernel = functools.partial(_fused_head_kernel, kc_pad=kc_pad)

    out_cls, out_bbox = pl.pallas_call(
        kernel,
        out_shape=(jax.ShapeDtypeStruct((n, kc_pad), out_dtype),
                   jax.ShapeDtypeStruct((n, kb_pad), out_dtype)),
        grid=grid,
        in_specs=[
            pl.BlockSpec((block_n, c), lambda i: (i, 0)),   # x: tiled over rows
            pl.BlockSpec((c, k_pad), lambda i: (0, 0)),     # fused weight: resident
            pl.BlockSpec((1, kc_pad), lambda i: (0, 0)),    # cls bias:     resident
            pl.BlockSpec((1, kb_pad), lambda i: (0, 0)),    # bbox bias:    resident
        ],
        out_specs=(pl.BlockSpec((block_n, kc_pad), lambda i: (i, 0)),
                   pl.BlockSpec((block_n, kb_pad), lambda i: (i, 0))),
        compiler_params=pltpu.CompilerParams(
            dimension_semantics=("parallel",)),
        cost_estimate=cost,
    )(x2d, w, bc, bb)

    # Only cheap lane-dim slices remain (padded lanes are zeros from padded
    # weight/bias columns, so this is pure trimming).
    scores = out_cls[:, :num_classes]
    bbox_deltas = out_bbox[:, :num_bbox]
    return scores, bbox_deltas


def init_params(key, in_channels, num_classes):
    """Deterministic init mimicking nn.Linear default (uniform +/- 1/sqrt(fan_in))."""
    k1, k2, k3, k4 = jax.random.split(key, 4)
    bound = 1.0 / jnp.sqrt(jnp.float32(in_channels))
    w_cls = jax.random.uniform(k1, (num_classes, in_channels), jnp.float32,
                               -bound, bound)
    b_cls = jax.random.uniform(k2, (num_classes,), jnp.float32, -bound, bound)
    w_bbox = jax.random.uniform(k3, (num_classes * 4, in_channels), jnp.float32,
                                -bound, bound)
    b_bbox = jax.random.uniform(k4, (num_classes * 4,), jnp.float32,
                                -bound, bound)
    return w_cls, b_cls, w_bbox, b_bbox


if __name__ == "__main__":
    batch = 2
    in_channels = 32
    num_classes = 8

    key = jax.random.PRNGKey(0)
    kx, kp = jax.random.split(key)

    # ROI-pooled features, NCHW with 1x1 spatial, as FastRCNNPredictor expects.
    x = jax.random.normal(kx, (batch, in_channels, 1, 1), jnp.float32)
    w_cls, b_cls, w_bbox, b_bbox = init_params(kp, in_channels, num_classes)

    # One-time parameter prep (transpose + per-head lane-pad + fuse + bf16 cast).
    params = prepare_params(w_cls, b_cls, w_bbox, b_bbox)

    predict = jax.jit(functools.partial(fastrcnn_predictor, params=params))
    scores, bbox_deltas = predict(x)
    jax.block_until_ready((scores, bbox_deltas))

    # Reference check in plain JAX (f32); bf16 compute -> loose tolerance.
    x_flat = x.reshape(batch, -1)
    ref_scores = x_flat @ w_cls.T + b_cls
    ref_bbox = x_flat @ w_bbox.T + b_bbox
    assert scores.shape == (batch, num_classes)
    assert bbox_deltas.shape == (batch, num_classes * 4)
    assert jnp.allclose(scores, ref_scores, atol=3e-2, rtol=3e-2), (
        jnp.max(jnp.abs(scores - ref_scores)))
    assert jnp.allclose(bbox_deltas, ref_bbox, atol=3e-2, rtol=3e-2), (
        jnp.max(jnp.abs(bbox_deltas - ref_bbox)))

    print("KERNEL_OK")
</pallas_src>

<mosaic_0001>
module attributes {stable_mosaic.version = 11 : i64} {
  func.func @_fused_head_kernel(%arg0: i32, %arg1: memref<8x32xf32, #tpu.memory_space<vmem>>, %arg2: memref<32x256xbf16, #tpu.memory_space<vmem>>, %arg3: memref<1x128xf32, #tpu.memory_space<vmem>>, %arg4: memref<1x128xf32, #tpu.memory_space<vmem>>, %arg5: memref<8x128xf32, #tpu.memory_space<vmem>>, %arg6: memref<8x128xf32, #tpu.memory_space<vmem>>) attributes {dimension_semantics = [#tpu.dimension_semantics<parallel>], iteration_bounds = array<i64: 1>, scalar_prefetch = 0 : i64, scratch_operands = 0 : i64, tpu.core_type = #tpu.core_type<tc>, window_params = [{transform_indices = @transform_0, window_bounds = array<i64: 8, 32>}, {pipeline_mode = #tpu.pipeline_mode<synchronous>, transform_indices = @transform_1, window_bounds = array<i64: 32, 256>}, {pipeline_mode = #tpu.pipeline_mode<synchronous>, transform_indices = @transform_2, window_bounds = array<i64: 1, 128>}, {pipeline_mode = #tpu.pipeline_mode<synchronous>, transform_indices = @transform_3, window_bounds = array<i64: 1, 128>}, {transform_indices = @transform_4, window_bounds = array<i64: 8, 128>}, {transform_indices = @transform_5, window_bounds = array<i64: 8, 128>}]} {
    %c0 = arith.constant 0 : index
    %c0_0 = arith.constant 0 : index
    %0 = vector.load %arg1[%c0, %c0_0] : memref<8x32xf32, #tpu.memory_space<vmem>>, vector<8x32xf32>
    %1 = arith.truncf %0 : vector<8x32xf32> to vector<8x32xbf16>
    %c0_1 = arith.constant 0 : index
    %c0_2 = arith.constant 0 : index
    %2 = vector.load %arg2[%c0_1, %c0_2] : memref<32x256xbf16, #tpu.memory_space<vmem>>, vector<32x256xbf16>
    %cst = arith.constant dense<0.000000e+00> : vector<8x256xf32>
    %3 = tpu.matmul %1, %2, %cst {dimension_numbers = #tpu.dot_dimension_numbers<[1], [0], [0], [1], [0, 0, 1, 1], [], []>} : vector<8x32xbf16>, vector<32x256xbf16>, vector<8x256xf32> -> vector<8x256xf32>
    %4 = vector.extract_strided_slice %3 {offsets = [0, 0], sizes = [8, 128], strides = [1, 1]} : vector<8x256xf32> to vector<8x128xf32>
    %c0_3 = arith.constant 0 : index
    %c0_4 = arith.constant 0 : index
    %5 = vector.load %arg3[%c0_3, %c0_4] : memref<1x128xf32, #tpu.memory_space<vmem>>, vector<1x128xf32>
    %6 = vector.broadcast %5 : vector<1x128xf32> to vector<8x128xf32>
    %7 = arith.addf %4, %6 : vector<8x128xf32>
    %c0_5 = arith.constant 0 : index
    %c0_6 = arith.constant 0 : index
    %8 = vector.load %arg5[%c0_5, %c0_6] : memref<8x128xf32, #tpu.memory_space<vmem>>, vector<8x128xf32>
    tpu.vector_store %arg5[%c0_5, %c0_6], %7 {strides = array<i32>} : memref<8x128xf32, #tpu.memory_space<vmem>>, vector<8x128xf32>,
    %9 = vector.extract_strided_slice %3 {offsets = [0, 128], sizes = [8, 128], strides = [1, 1]} : vector<8x256xf32> to vector<8x128xf32>
    %c0_7 = arith.constant 0 : index
    %c0_8 = arith.constant 0 : index
    %10 = vector.load %arg4[%c0_7, %c0_8] : memref<1x128xf32, #tpu.memory_space<vmem>>, vector<1x128xf32>
    %11 = vector.broadcast %10 : vector<1x128xf32> to vector<8x128xf32>
    %12 = arith.addf %9, %11 : vector<8x128xf32>
    %c0_9 = arith.constant 0 : index
    %c0_10 = arith.constant 0 : index
    %13 = vector.load %arg6[%c0_9, %c0_10] : memref<8x128xf32, #tpu.memory_space<vmem>>, vector<8x128xf32>
    tpu.vector_store %arg6[%c0_9, %c0_10], %12 {strides = array<i32>} : memref<8x128xf32, #tpu.memory_space<vmem>>, vector<8x128xf32>,
    return
  }
  func.func @transform_0(%arg0: i32) -> (i32, i32) {
    %c0_i32 = arith.constant 0 : i32
    %c0_i32_0 = arith.constant 0 : i32
    return %arg0, %c0_i32 : i32, i32
  }
  func.func @transform_1(%arg0: i32) -> (i32, i32) {
    %c0_i32 = arith.constant 0 : i32
    %c0_i32_0 = arith.constant 0 : i32
    %c0_i32_1 = arith.constant 0 : i32
    return %c0_i32, %c0_i32_0 : i32, i32
  }
  func.func @transform_2(%arg0: i32) -> (i32, i32) {
    %c0_i32 = arith.constant 0 : i32
    %c0_i32_0 = arith.constant 0 : i32
    %c0_i32_1 = arith.constant 0 : i32
    return %c0_i32, %c0_i32_0 : i32, i32
  }
  func.func @transform_3(%arg0: i32) -> (i32, i32) {
    %c0_i32 = arith.constant 0 : i32
    %c0_i32_0 = arith.constant 0 : i32
    %c0_i32_1 = arith.constant 0 : i32
    return %c0_i32, %c0_i32_0 : i32, i32
  }
  func.func @transform_4(%arg0: i32) -> (i32, i32) {
    %c0_i32 = arith.constant 0 : i32
    %c0_i32_0 = arith.constant 0 : i32
    return %arg0, %c0_i32 : i32, i32
  }
  func.func @transform_5(%arg0: i32) -> (i32, i32) {
    %c0_i32 = arith.constant 0 : i32
    %c0_i32_0 = arith.constant 0 : i32
    return %arg0, %c0_i32 : i32, i32
  }
}

</mosaic_0001>

<llo_original>
// kernel: fastrcnn_predictor.1
$region0: #{fastrcnn_predictor.1}
  #allocation0 [shape = 'u32[]', space=smem, size = 0x4, offset = 0x4, fixed_abs, tag = 'smem constant byte address 0x4 - core index']
  #allocation1 [shape = 'u32[144,128]{1,0:T(1,128)}', space=vmem, size = 0x12000, scoped, tag = 'internal scratch']
  %s0 = inlined_call_operand.vmem [shape: f32[2,32], index: 0, kind: input, shape index: {}]
  %s1 = inlined_call_operand.vmem [shape: bf16[32,256], index: 1, kind: input, shape index: {}]
  %s2 = inlined_call_operand.vmem [shape: f32[1,128], index: 2, kind: input, shape index: {}]
  %s3 = inlined_call_operand.vmem [shape: f32[1,128], index: 3, kind: input, shape index: {}]
  %s4 = inlined_call_operand.hbm [shape: f32[2,128], index: 4, kind: output, shape index: {0}]
  %s5 = inlined_call_operand.hbm [shape: f32[2,128], index: 5, kind: output, shape index: {1}]
  %6 = xla_tuple %s4, %s5
  %s7 = sld [smem:[#allocation0]]
  $region34: #{fastrcnn_predictor.1} parent=0
    _
  %s9 = ssub.s32 1, %s7
  %s10 = scalar_select 0, %s9, %s7
  $region1: #{fastrcnn_predictor.1} parent=0
    #allocation2 [shape = 'u8[4096]{0}', space=vmem, size = 0x1000, scoped, tag = 'output window, operand 0, single buffered']
    #allocation3 [shape = 's32[1]{0}', space=sflag, size = 0x4, scoped, tag = 'scoped memory for fastrcnn_predictor.1']
    #allocation4 [shape = 'u8[4096]{0}', space=vmem, size = 0x1000, scoped, tag = 'output window, operand 1, single buffered']
    #allocation5 [shape = 's32[1]{0}', space=sflag, size = 0x4, scoped, tag = 'scoped memory for fastrcnn_predictor.1']
    %11 = vsyncpa [#allocation3], 0
    %12 = vsyncpa [#allocation5], 0
    // Predicated region
    $region2: #{fastrcnn_predictor.1} parent=1 // pred_check
      _
    $region3: #{fastrcnn_predictor.1} parent=1 // pred_check_branch
      %14 = sbr.rel (0) target = $region5
    $region4: #{fastrcnn_predictor.1} parent=1 // pred_region
      _
    $region5: #{fastrcnn_predictor.1} parent=1 // pred_fallthru
      _
    // Predicated region
    $region6: #{fastrcnn_predictor.1} parent=1 // pred_check
      _
    $region7: #{fastrcnn_predictor.1} parent=1 // pred_check_branch
      %16 = sbr.rel (0) target = $region9
    $region8: #{fastrcnn_predictor.1} parent=1 // pred_region
      _
    $region9: #{fastrcnn_predictor.1} parent=1 // pred_fallthru
      _
    // Predicated region
    $region10: #{fastrcnn_predictor.1} parent=1 // pred_check
      _
    $region11: #{fastrcnn_predictor.1} parent=1 // pred_check_branch
      %18 = sbr.rel (0) target = $region13
    $region12: #{fastrcnn_predictor.1} parent=1 // pred_region
      _
    $region13: #{fastrcnn_predictor.1} parent=1 // pred_fallthru
      _
    // Predicated region
    $region14: #{fastrcnn_predictor.1} parent=1 // pred_check
      _
    $region15: #{fastrcnn_predictor.1} parent=1 // pred_check_branch
      %20 = sbr.rel (0) target = $region17
    $region16: #{fastrcnn_predictor.1} parent=1 // pred_region
      _
    $region17: #{fastrcnn_predictor.1} parent=1 // pred_fallthru
      _
    %v22 = vld [vmem:[%s0] sm:$0xff]
    %v23 = vpack.c.bf16 %v22, %v22
    %v24 = vld [vmem:[%s1] sm:$0xff]
    %v25 = vld [vmem:[%s1 + $0x8] sm:$0xff]
    %v26 = vld [vmem:[%s1 + $0x10] sm:$0xff]
    %v27 = vld [vmem:[%s1 + $0x18] sm:$0xff]
    %v32 = vunpack.c.l.b16 %v24
    %v33 = vunpack.c.h.b16 %v24
    %v34 = vunpack.c.l.b16 %v25
    %v35 = vunpack.c.h.b16 %v25
    %v36 = vunpack.c.l.b16 %v26
    %v37 = vunpack.c.h.b16 %v26
    %v38 = vunpack.c.l.b16 %v27
    %v39 = vunpack.c.h.b16 %v27
    %v40 = vpack.c.b16 %v34, %v32
    %v41 = vpack.c.b16 %v35, %v33
    %v42 = vpack.c.b16 %v38, %v36
    %v43 = vpack.c.b16 %v39, %v37
    %vm48 = vcmask 261120
    %v50 = vsel %vm48, %v23, 0
    %52 = vmatprep.subr.bf16.mxu0 %v41
    %53 = vmatpush1.bf16.msra.mxu0 %v40
    %54 = vmatprep.subr.bf16.mxu0 %v43
    %55 = vmatpush1.bf16.msra.mxu0 %v42
    %56 = vmatprep.subr.bf16.mxu0 0
    %57 = vmatpush1.bf16.msra.mxu0 0
    %58 = vmatprep.subr.bf16.mxu0 0
    %59 = vmatpush1.bf16.msra.mxu0 0
    %60 = vmatprep.subr.bf16.mxu0 0
    %61 = vmatpush1.bf16.msra.mxu0 0
    %62 = vmatprep.subr.bf16.mxu0 0
    %63 = vmatpush1.bf16.msra.mxu0 0
    %64 = vmatprep.subr.bf16.mxu0 0
    %65 = vmatpush1.bf16.msra.mxu0 0
    %66 = vmatprep.subr.bf16.mxu0 0
    %67 = vmatpush1.bf16.msra.mxu0 0
    %68 = vmatprep.subr.bf16.mxu0 0
    %69 = vmatpush1.bf16.msra.mxu0 0
    %70 = vmatprep.subr.bf16.mxu0 0
    %71 = vmatpush1.bf16.msra.mxu0 0
    %72 = vmatprep.subr.bf16.mxu0 0
    %73 = vmatpush1.bf16.msra.mxu0 0
    %74 = vmatprep.subr.bf16.mxu0 0
    %75 = vmatpush1.bf16.msra.mxu0 0
    %76 = vmatprep.subr.bf16.mxu0 0
    %77 = vmatpush1.bf16.msra.mxu0 0
    %78 = vmatprep.subr.bf16.mxu0 0
    %79 = vmatpush1.bf16.msra.mxu0 0
    %80 = vmatprep.subr.bf16.mxu0 0
    %81 = vmatpush1.bf16.msra.mxu0 0
    %82 = vmatprep.subr.bf16.mxu0 0
    %83 = vmatpush1.bf16.msra.mxu0 0
    %84 = vmatprep.mubr.bf16.mxu0 0
    %85 = vmatmul.mubr.bf16.gmra.mrb[0].mxu0 %v50
    %v86 = vpop.f32.mrb[0].mxu0
    %v87 = vadd.f32 0.0, %v86
    %v88 = vpop.f32.mrb[0].mxu0
    %v89 = vadd.f32 0.0, %v88
    %v90 = vpop.f32.mrb[0].mxu0
    %v91 = vpop.f32.mrb[0].mxu0
    %92 = vdwg.mxu0
    %v93 = vld [vmem:[%s2] sm:$0x1]
    %v95 = vlaneseq
    %v96 = vshrl.u32 %v95, 7
    %v97 = vsub.s32 0, %v96
    %v98 = vrot.slane %v93, %v97
    %v100 = vadd.f32 %v87, %v98
    %101 = vst [vmem:[#allocation2] sm:$0xff] %v100
    %v102 = vld [vmem:[%s3] sm:$0x1]
    %v104 = vlaneseq
    %v105 = vshrl.u32 %v104, 7
    %v106 = vsub.s32 0, %v105
    %v107 = vrot.slane %v102, %v106
    %v109 = vadd.f32 %v89, %v107
    %110 = vst [vmem:[#allocation4] sm:$0xff] %v109
    // Predicated region
    $region18: #{fastrcnn_predictor.1} parent=1 // pred_check
      _
    $region19: #{fastrcnn_predictor.1} parent=1 // pred_check_branch
      %112 = sbr.rel (0) target = $region21
    $region20: #{fastrcnn_predictor.1} parent=1 // pred_region
      %s114 = ssub.s32 128, 32
      %115 = vsyncadd [#allocation3], %s114
      %s116 = sshll.u32 [#allocation2], 4
      %s117 = int_to_ptr.vmem [resolvable:$true] %s116
      %122 = dma.vmem_to_hbm [thread:$0]  %s117, 32, %s4, [#allocation3], 32, 32, 2
    $region21: #{fastrcnn_predictor.1} parent=1 // pred_fallthru
      _
    // Predicated region
    $region22: #{fastrcnn_predictor.1} parent=1 // pred_check
      _
    $region23: #{fastrcnn_predictor.1} parent=1 // pred_check_branch
      %124 = sbr.rel (0) target = $region25
    $region24: #{fastrcnn_predictor.1} parent=1 // pred_region
      %s126 = ssub.s32 128, 32
      %127 = vsyncadd [#allocation5], %s126
      %s128 = sshll.u32 [#allocation4], 4
      %s129 = int_to_ptr.vmem [resolvable:$true] %s128
      %134 = dma.vmem_to_hbm [thread:$0]  %s129, 32, %s5, [#allocation5], 32, 32, 2
    $region25: #{fastrcnn_predictor.1} parent=1 // pred_fallthru
      _
    // Predicated region
    $region26: #{fastrcnn_predictor.1} parent=1 // pred_check
      _
    $region27: #{fastrcnn_predictor.1} parent=1 // pred_check_branch
      %136 = sbr.rel (0) target = $region29
    $region28: #{fastrcnn_predictor.1} parent=1 // pred_region
      %137 = dma.done [#allocation3], 128
    $region29: #{fastrcnn_predictor.1} parent=1 // pred_fallthru
      _
    // Predicated region
    $region30: #{fastrcnn_predictor.1} parent=1 // pred_check
      _
    $region31: #{fastrcnn_predictor.1} parent=1 // pred_check_branch
      %139 = sbr.rel (0) target = $region33
    $region32: #{fastrcnn_predictor.1} parent=1 // pred_region
      %140 = dma.done [#allocation5], 128
    $region33: #{fastrcnn_predictor.1} parent=1 // pred_fallthru
      _
    %141 = vsyncpa [#allocation3], 1
    %142 = vsyncpa [#allocation5], 1

</llo_original>
